<compile_context>
chip_gen: v7x
topology: tpu7x:2x2x1
jax: 0.10.0
libtpu: 0.0.40
codegen_flags: <defaults>
</compile_context>

<pallas_src>
import functools

import jax
import jax.numpy as jnp
from jax import lax
from jax.experimental import pallas as pl
from jax.experimental.pallas import tpu as pltpu


def _vq_kernel(z_ref, e_ref, esqh_ref, q_ref, ssep_ref, *, tile_n, n_valid):
    i = pl.program_id(0)

    z_in = z_ref[...]                          # (tile_n, D), native dtype
    e_in = e_ref[...]                          # (K, D), native dtype
    K = e_in.shape[0]

    # argmin_k |z - e_k|^2 == argmin_k (0.5*|e_k|^2 - z.e_k): the per-row |z|^2
    # constant is dropped and the "-2*" scale is folded into the precomputed
    # 0.5*|E|^2 row -> one MXU matmul + one broadcast subtract.
    zdote = lax.dot_general(z_in, e_in, (((1,), (1,)), ((), ())),
                            preferred_element_type=jnp.float32)      # (tile_n, K)
    d = esqh_ref[...] - zdote                                        # (tile_n, K)

    # First-minimum index (matches torch.argmin tie-breaking).  NOTE: min_d is
    # only a tie-break key, not a true distance (|z|^2 was dropped).
    col = lax.broadcasted_iota(jnp.int32, d.shape, 1)
    min_d = jnp.min(d, axis=1, keepdims=True)
    idx = jnp.min(jnp.where(d == min_d, col, K), axis=1, keepdims=True)
    idx = jnp.minimum(idx, K - 1)              # NaN rows can never zero the one-hot

    # Codebook gather as a one-hot matmul (MXU-friendly, no gather op).
    onehot = (col == idx).astype(e_in.dtype)                         # (tile_n, K)
    q = jnp.dot(onehot, e_in, preferred_element_type=jnp.float32)    # (tile_n, D)
    q_out = q.astype(q_ref.dtype)
    q_ref[...] = q_out

    # Per-tile partial SSE on the stored dtype; rows added by padding are masked.
    row = i * tile_n + lax.broadcasted_iota(jnp.int32, (tile_n, 1), 0)
    valid = (row < n_valid).astype(jnp.float32)                      # (tile_n, 1)
    diff = q_out.astype(jnp.float32) - z_in.astype(jnp.float32)
    # Lane-dense (1, 128) partial write (broadcast scalar) -> unmasked vst.
    ssep_ref[...] = jnp.full((1, 128), jnp.sum(diff * diff * valid), jnp.float32)


def _choose_tile_n(n_rows, k, requested=None):
    """Rows per grid step: large tiles for small K, >= 2 tiles for v7x megacore."""
    if requested is None:
        budget = 6 * 1024 * 1024                       # (tile, K) f32 intermediates
        tile = min(1024, max(64, budget // (3 * 4 * k)))
        tile = min(tile, n_rows)                       # never exceed the problem
        if n_rows > 8:                                 # keep both v7x TCs busy
            tile = min(tile, -(-n_rows // 2))
    else:
        tile = requested
    return max(8, -(-tile // 8) * 8)                   # sublane (8) alignment


def vector_quantize(z, embedding, beta=0.25, tile_n=None):
    """Pallas TPU implementation of VectorQuantizer.forward.

    z:         (..., D) array, channels-last.
    embedding: (K, D) codebook.
    Returns (quantized, loss) matching the PyTorch forward values.
    """
    K, D = embedding.shape
    z_flat = z.reshape(-1, D)
    N = z_flat.shape[0]

    tile = _choose_tile_n(N, K, tile_n)
    n_tiles = pl.cdiv(N, tile)
    n_pad = n_tiles * tile
    if n_pad != N:
        z_flat = jnp.pad(z_flat, ((0, n_pad - N), (0, 0)))

    # Codebook-invariant prep hoisted out of the kernel; the 0.5 factor folds
    # the "-2 * z @ E^T" scaling away inside the kernel.
    e_sq_half = 0.5 * jnp.sum(embedding.astype(jnp.float32) ** 2, axis=1)[None, :]

    e_bytes = jnp.dtype(embedding.dtype).itemsize
    z_bytes = jnp.dtype(z.dtype).itemsize

    # Codebook / |E|^2 index_maps are constant; for big codebooks drop their
    # double buffers (halves their VMEM footprint -- matters on v7x's 64 MiB).
    invariant_kwargs = {}
    if K * D * e_bytes >= (1 << 20):
        invariant_kwargs = dict(pipeline_mode=pl.Buffered(1))

    # Raise the scoped VMEM limit only when the working set needs it
    # (v5e's default scoped limit is 16 MiB).
    vmem_est = (4 * tile * D * max(z_bytes, 4)                       # z in + q out, x2 buffers
                + (1 if invariant_kwargs else 2) * (K * D * e_bytes + 4 * K)
                + 4 * tile * K * 4)                                  # f32/i32 intermediates
    cp_kwargs = dict(dimension_semantics=("parallel",))              # megacore OK
    if vmem_est > 12 * 1024 * 1024:
        cp_kwargs["vmem_limit_bytes"] = int(min(100 * 1024 * 1024, 2 * vmem_est))

    kernel = functools.partial(_vq_kernel, tile_n=tile, n_valid=N)

    q_flat, sse_partials = pl.pallas_call(
        kernel,
        out_shape=(
            jax.ShapeDtypeStruct((n_pad, D), z.dtype),
            jax.ShapeDtypeStruct((1, n_tiles * 128), jnp.float32),
        ),
        grid_spec=pltpu.PrefetchScalarGridSpec(
            num_scalar_prefetch=0,
            grid=(n_tiles,),
            in_specs=[
                pl.BlockSpec((tile, D), lambda i: (i, 0)),                   # z tile
                pl.BlockSpec((K, D), lambda i: (0, 0), **invariant_kwargs),  # codebook
                pl.BlockSpec((1, K), lambda i: (0, 0), **invariant_kwargs),  # 0.5*|E|^2
            ],
            out_specs=[
                pl.BlockSpec((tile, D), lambda i: (i, 0)),    # quantized tile
                pl.BlockSpec((1, 128), lambda i: (0, i)),     # per-tile SSE (lane-dense)
            ],
        ),
        compiler_params=pltpu.CompilerParams(**cp_kwargs),
    )(z_flat, embedding, e_sq_half)

    sse = jnp.sum(sse_partials.reshape(n_tiles, 128)[:, 0])
    mse = sse / jnp.float32(N * D)
    loss = beta * mse + mse                     # commitment + codebook (same forward value)

    quantized = q_flat[:N].reshape(z.shape)
    # Straight-through estimator (value-identical in the forward pass).
    quantized = z + lax.stop_gradient(quantized - z)
    return quantized, loss


def _reference(z, embedding, beta=0.25):
    D = embedding.shape[1]
    zf = z.reshape(-1, D).astype(jnp.float32)
    e = embedding.astype(jnp.float32)
    d = (jnp.sum(zf ** 2, axis=1, keepdims=True)
         - 2.0 * zf @ e.T
         + jnp.sum(e ** 2, axis=1))
    idx = jnp.argmin(d, axis=1)
    q = e[idx].astype(z.dtype).reshape(z.shape)
    mse = jnp.mean((q.astype(jnp.float32) - z.astype(jnp.float32)) ** 2)
    return q, beta * mse + mse


if __name__ == "__main__":
    key = jax.random.PRNGKey(0)
    k_z, k_e = jax.random.split(key)

    num_embeddings = 64     # K
    embedding_dim = 32      # D
    B, H, W = 2, 8, 8       # N = B*H*W = 128 rows -> 2 grid steps of 64 rows

    # Deterministic init matching nn.Embedding + uniform_(-1/K, 1/K).
    embedding = jax.random.uniform(
        k_e, (num_embeddings, embedding_dim), jnp.float32,
        minval=-1.0 / num_embeddings, maxval=1.0 / num_embeddings)
    z = jax.random.normal(k_z, (B, H, W, embedding_dim), jnp.float32)

    vq = jax.jit(functools.partial(vector_quantize, beta=0.25))
    quantized, loss = vq(z, embedding)
    quantized = jax.block_until_ready(quantized)
    loss = jax.block_until_ready(loss)

    q_ref, loss_ref = _reference(z, embedding, beta=0.25)
    assert jnp.allclose(quantized, q_ref, atol=1e-5, rtol=1e-5)
    assert jnp.allclose(loss, loss_ref, atol=1e-5, rtol=1e-5)

    print("KERNEL_OK")
</pallas_src>

<mosaic_0001>
module attributes {stable_mosaic.version = 11 : i64} {
  func.func @_vq_kernel(%arg0: i32, %arg1: memref<64x32xf32, #tpu.memory_space<vmem>>, %arg2: memref<64x32xf32, #tpu.memory_space<vmem>>, %arg3: memref<1x64xf32, #tpu.memory_space<vmem>>, %arg4: memref<64x32xf32, #tpu.memory_space<vmem>>, %arg5: memref<1x128xf32, #tpu.memory_space<vmem>>) attributes {dimension_semantics = [#tpu.dimension_semantics<parallel>], iteration_bounds = array<i64: 2>, scalar_prefetch = 0 : i64, scratch_operands = 0 : i64, tpu.core_type = #tpu.core_type<tc>, window_params = [{transform_indices = @transform_0, window_bounds = array<i64: 64, 32>}, {pipeline_mode = #tpu.pipeline_mode<synchronous>, transform_indices = @transform_1, window_bounds = array<i64: 64, 32>}, {pipeline_mode = #tpu.pipeline_mode<synchronous>, transform_indices = @transform_2, window_bounds = array<i64: 1, 64>}, {transform_indices = @transform_3, window_bounds = array<i64: 64, 32>}, {transform_indices = @transform_4, window_bounds = array<i64: 1, 128>}]} {
    %c0 = arith.constant 0 : index
    %c0_0 = arith.constant 0 : index
    %0 = vector.load %arg1[%c0, %c0_0] : memref<64x32xf32, #tpu.memory_space<vmem>>, vector<64x32xf32>
    %c0_1 = arith.constant 0 : index
    %c0_2 = arith.constant 0 : index
    %1 = vector.load %arg2[%c0_1, %c0_2] : memref<64x32xf32, #tpu.memory_space<vmem>>, vector<64x32xf32>
    %cst = arith.constant dense<0.000000e+00> : vector<64x64xf32>
    %2 = tpu.matmul %0, %1, %cst {dimension_numbers = #tpu.dot_dimension_numbers<[1], [1], [0], [0], [0, 0, 1, 0], [], []>} : vector<64x32xf32>, vector<64x32xf32>, vector<64x64xf32> -> vector<64x64xf32>
    %c0_3 = arith.constant 0 : index
    %c0_4 = arith.constant 0 : index
    %3 = vector.load %arg3[%c0_3, %c0_4] : memref<1x64xf32, #tpu.memory_space<vmem>>, vector<1x64xf32>
    %4 = vector.broadcast %3 : vector<1x64xf32> to vector<64x64xf32>
    %5 = arith.subf %4, %2 : vector<64x64xf32>
    %6 = tpu.iota {dimensions = array<i32: 1>} : vector<64x64xi32>
    %cst_5 = arith.constant dense<0x7F800000> : vector<64xf32>
    %7 = vector.multi_reduction <minimumf>, %5, %cst_5 [1] : vector<64x64xf32> to vector<64xf32>
    %8 = vector.shape_cast %7 : vector<64xf32> to vector<64x1xf32>
    %9 = vector.broadcast %8 : vector<64x1xf32> to vector<64x64xf32>
    %10 = arith.cmpf oeq, %5, %9 : vector<64x64xf32>
    %c64_i32 = arith.constant 64 : i32
    %11 = vector.broadcast %c64_i32 : i32 to vector<64x64xi32>
    %12 = arith.select %10, %6, %11 : vector<64x64xi1>, vector<64x64xi32>
    %cst_6 = arith.constant dense<2147483647> : vector<64xi32>
    %13 = vector.multi_reduction <minsi>, %12, %cst_6 [1] : vector<64x64xi32> to vector<64xi32>
    %14 = vector.shape_cast %13 : vector<64xi32> to vector<64x1xi32>
    %c63_i32 = arith.constant 63 : i32
    %15 = vector.broadcast %c63_i32 : i32 to vector<64x1xi32>
    %16 = arith.minsi %14, %15 : vector<64x1xi32>
    %17 = vector.broadcast %16 : vector<64x1xi32> to vector<64x64xi32>
    %18 = arith.cmpi eq, %6, %17 : vector<64x64xi32>
    %19 = arith.extui %18 : vector<64x64xi1> to vector<64x64xi32>
    %20 = arith.sitofp %19 : vector<64x64xi32> to vector<64x64xf32>
    %cst_7 = arith.constant dense<0.000000e+00> : vector<64x32xf32>
    %21 = tpu.matmul %20, %1, %cst_7 {dimension_numbers = #tpu.dot_dimension_numbers<[1], [0], [0], [1], [0, 0, 1, 1], [], []>} : vector<64x64xf32>, vector<64x32xf32>, vector<64x32xf32> -> vector<64x32xf32>
    %c0_8 = arith.constant 0 : index
    %c0_9 = arith.constant 0 : index
    %22 = vector.load %arg4[%c0_8, %c0_9] : memref<64x32xf32, #tpu.memory_space<vmem>>, vector<64x32xf32>
    tpu.vector_store %arg4[%c0_8, %c0_9], %21 {strides = array<i32>} : memref<64x32xf32, #tpu.memory_space<vmem>>, vector<64x32xf32>,
    %c64_i32_10 = arith.constant 64 : i32
    %23 = arith.muli %arg0, %c64_i32_10 : i32
    %24 = tpu.iota {dimensions = array<i32: 0>} : vector<64x1xi32>
    %25 = vector.broadcast %23 : i32 to vector<64x1xi32>
    %26 = arith.addi %25, %24 : vector<64x1xi32>
    %c128_i32 = arith.constant 128 : i32
    %27 = vector.broadcast %c128_i32 : i32 to vector<64x1xi32>
    %28 = arith.cmpi slt, %26, %27 : vector<64x1xi32>
    %29 = arith.extui %28 : vector<64x1xi1> to vector<64x1xi32>
    %30 = arith.sitofp %29 : vector<64x1xi32> to vector<64x1xf32>
    %31 = arith.subf %21, %0 : vector<64x32xf32>
    %32 = arith.mulf %31, %31 : vector<64x32xf32>
    %33 = vector.broadcast %30 : vector<64x1xf32> to vector<64x32xf32>
    %34 = arith.mulf %32, %33 : vector<64x32xf32>
    %35 = vector.shape_cast %34 : vector<64x32xf32> to vector<1x64x32xf32>
    %cst_11 = arith.constant dense<0.000000e+00> : vector<1xf32>
    %36 = vector.multi_reduction <add>, %35, %cst_11 [1, 2] : vector<1x64x32xf32> to vector<1xf32>
    %37 = vector.shape_cast %36 : vector<1xf32> to vector<1x1x1xf32>
    %38 = vector.extract %37[0, 0, 0] : f32 from vector<1x1x1xf32>
    %39 = vector.broadcast %38 : f32 to vector<1x128xf32>
    %c0_12 = arith.constant 0 : index
    %c0_13 = arith.constant 0 : index
    %40 = vector.load %arg5[%c0_12, %c0_13] : memref<1x128xf32, #tpu.memory_space<vmem>>, vector<1x128xf32>
    tpu.vector_store %arg5[%c0_12, %c0_13], %39 {strides = array<i32>} : memref<1x128xf32, #tpu.memory_space<vmem>>, vector<1x128xf32>,
    return
  }
  func.func @transform_0(%arg0: i32) -> (i32, i32) {
    %c0_i32 = arith.constant 0 : i32
    %c0_i32_0 = arith.constant 0 : i32
    return %arg0, %c0_i32 : i32, i32
  }
  func.func @transform_1(%arg0: i32) -> (i32, i32) {
    %c0_i32 = arith.constant 0 : i32
    %c0_i32_0 = arith.constant 0 : i32
    %c0_i32_1 = arith.constant 0 : i32
    return %c0_i32, %c0_i32_0 : i32, i32
  }
  func.func @transform_2(%arg0: i32) -> (i32, i32) {
    %c0_i32 = arith.constant 0 : i32
    %c0_i32_0 = arith.constant 0 : i32
    %c0_i32_1 = arith.constant 0 : i32
    return %c0_i32, %c0_i32_0 : i32, i32
  }
  func.func @transform_3(%arg0: i32) -> (i32, i32) {
    %c0_i32 = arith.constant 0 : i32
    %c0_i32_0 = arith.constant 0 : i32
    return %arg0, %c0_i32 : i32, i32
  }
  func.func @transform_4(%arg0: i32) -> (i32, i32) {
    %c0_i32 = arith.constant 0 : i32
    %c0_i32_0 = arith.constant 0 : i32
    return %c0_i32, %arg0 : i32, i32
  }
}

</mosaic_0001>

<llo_original>
// kernel: vector_quantize.1
$region0: #{vector_quantize.1}
  #allocation0 [shape = 'u32[]', space=smem, size = 0x4, offset = 0x4, fixed_abs, tag = 'smem constant byte address 0x4 - core index']
  #allocation1 [shape = 'u32[144,128]{1,0:T(1,128)}', space=vmem, size = 0x12000, scoped, tag = 'internal scratch']
  %s0 = inlined_call_operand.vmem [shape: f32[128,32], index: 0, kind: input, shape index: {}]
  %s1 = inlined_call_operand.vmem [shape: f32[64,32], index: 1, kind: input, shape index: {}]
  %s2 = inlined_call_operand.vmem [shape: f32[1,64], index: 2, kind: input, shape index: {}]
  %s3 = inlined_call_operand.vmem [shape: f32[128,32], index: 3, kind: output, shape index: {0}]
  %s4 = inlined_call_operand.vmem [shape: f32[1,256], index: 4, kind: output, shape index: {1}]
  %5 = xla_tuple %s3, %s4
  %s6 = sld [smem:[#allocation0]]
  $region53: #{vector_quantize.1} parent=0
    _
  %s8 = ssub.s32 1, %s6
  %s9 = scalar_select 0, %s8, %s6
  loop: start=0, step=1, limit=4
  $region2: #{vector_quantize.1} parent=0 // loop_pre_header
    _
  $region3: #{vector_quantize.1} parent=0 // loop_header
    %s11 = sphi 0, %s15
    %p12 = scmp.ge.s32.totalorder %s11, 4
    %s21 = sphi 0, %s23
    %s24 = sphi 0, %s21
    %s25 = sphi 0, %s24
    %s41 = sphi 0, %s25
    %s45 = sphi 0, %s45
    %s47 = sphi 0, %s45
    %s48 = sphi 0, %s47
    %s62 = sphi 0, %s48
    %s66 = sphi 0, %s66
    %s68 = sphi 0, %s66
    %s69 = sphi 0, %s68
    %s83 = sphi 0, %s69
    %s89 = sphi 0, %s91
    %s92 = sphi 0, %s89
    %s93 = sphi 0, %s92
    %s109 = sphi 0, %s93
    %s115 = sphi 0, %s117
    %s118 = sphi 0, %s115
    %s119 = sphi 0, %s118
    %s135 = sphi 0, %s119
  $region4: #{vector_quantize.1} parent=0 // loop_header_branch
    %14 = sbr.rel (%p12) target = $region8
  $region5: #{vector_quantize.1} parent=0 // loop_body
    %s16 = ssub.s32 %s11, 1
    %s17 = ssub.s32 %s11, 2
    %s18 = sadd.s32 %s11, 1
    %s19 = ssub.s32 %s11, %s18
    %p20 = scmp.eq.s32.totalorder %s19, 0
    %s22 = sadd.s32 %s21, 1
    %s23 = scalar_select %p20, %s21, %s22
    %p26 = pneg %p20
    %p27 = scmp.eq.s32.totalorder %s11, 1
    %p28 = por %p26, %p27
    %p29 = scmp.ne.s32.totalorder %s21, %s24
    %p30 = scmp.eq.s32.totalorder %s11, 0
    %p31 = por %p29, %p30
    %p32 = scmp.ne.s32.totalorder %s21, %s24
    %p33 = scmp.eq.s32.totalorder %s16, 1
    %p34 = por %p32, %p33
    %p35 = scmp.ne.s32.totalorder %s24, %s25
    %p36 = scmp.eq.s32.totalorder %s16, 0
    %p37 = por %p35, %p36
    %p38 = scmp.ne.s32.totalorder %s24, %s25
    %p39 = scmp.eq.s32.totalorder %s17, 1
    %p40 = por %p38, %p39
    %p42 = scmp.ne.s32.totalorder %s25, %s41
    %p43 = scmp.eq.s32.totalorder %s17, 0
    %p44 = por %p42, %p43
    %s46 = sadd.s32 %s45, 1
    %p49 = scmp.eq.s32.totalorder %s11, 1
    %p50 = scmp.ne.s32.totalorder %s45, %s47
    %p51 = scmp.eq.s32.totalorder %s11, 0
    %p52 = por %p50, %p51
    %p53 = scmp.ne.s32.totalorder %s45, %s47
    %p54 = scmp.eq.s32.totalorder %s16, 1
    %p55 = por %p53, %p54
    %p56 = scmp.ne.s32.totalorder %s47, %s48
    %p57 = scmp.eq.s32.totalorder %s16, 0
    %p58 = por %p56, %p57
    %p59 = scmp.ne.s32.totalorder %s47, %s48
    %p60 = scmp.eq.s32.totalorder %s17, 1
    %p61 = por %p59, %p60
    %p63 = scmp.ne.s32.totalorder %s48, %s62
    %p64 = scmp.eq.s32.totalorder %s17, 0
    %p65 = por %p63, %p64
    %s67 = sadd.s32 %s66, 1
    %p70 = scmp.eq.s32.totalorder %s11, 1
    %p71 = scmp.ne.s32.totalorder %s66, %s68
    %p72 = scmp.eq.s32.totalorder %s11, 0
    %p73 = por %p71, %p72
    %p74 = scmp.ne.s32.totalorder %s66, %s68
    %p75 = scmp.eq.s32.totalorder %s16, 1
    %p76 = por %p74, %p75
    %p77 = scmp.ne.s32.totalorder %s68, %s69
    %p78 = scmp.eq.s32.totalorder %s16, 0
    %p79 = por %p77, %p78
    %p80 = scmp.ne.s32.totalorder %s68, %s69
    %p81 = scmp.eq.s32.totalorder %s17, 1
    %p82 = por %p80, %p81
    %p84 = scmp.ne.s32.totalorder %s69, %s83
    %p85 = scmp.eq.s32.totalorder %s17, 0
    %p86 = por %p84, %p85
    %s87 = ssub.s32 %s11, %s18
    %p88 = scmp.eq.s32.totalorder %s87, 0
    %s90 = sadd.s32 %s89, 1
    %s91 = scalar_select %p88, %s89, %s90
    %p94 = pneg %p88
    %p95 = scmp.eq.s32.totalorder %s11, 1
    %p96 = por %p94, %p95
    %p97 = scmp.ne.s32.totalorder %s89, %s92
    %p98 = scmp.eq.s32.totalorder %s11, 0
    %p99 = por %p97, %p98
    %p100 = scmp.ne.s32.totalorder %s89, %s92
    %p101 = scmp.eq.s32.totalorder %s16, 1
    %p102 = por %p100, %p101
    %p103 = scmp.ne.s32.totalorder %s92, %s93
    %p104 = scmp.eq.s32.totalorder %s16, 0
    %p105 = por %p103, %p104
    %p106 = scmp.ne.s32.totalorder %s92, %s93
    %p107 = scmp.eq.s32.totalorder %s17, 1
    %p108 = por %p106, %p107
    %p110 = scmp.ne.s32.totalorder %s93, %s109
    %p111 = scmp.eq.s32.totalorder %s17, 0
    %p112 = por %p110, %p111
    %s113 = ssub.s32 %s11, %s18
    %p114 = scmp.eq.s32.totalorder %s113, 0
    %s116 = sadd.s32 %s115, 1
    %s117 = scalar_select %p114, %s115, %s116
    %p120 = pneg %p114
    %p121 = scmp.eq.s32.totalorder %s11, 1
    %p122 = por %p120, %p121
    %p123 = scmp.ne.s32.totalorder %s115, %s118
    %p124 = scmp.eq.s32.totalorder %s11, 0
    %p125 = por %p123, %p124
    %p126 = scmp.ne.s32.totalorder %s115, %s118
    %p127 = scmp.eq.s32.totalorder %s16, 1
    %p128 = por %p126, %p127
    %p129 = scmp.ne.s32.totalorder %s118, %s119
    %p130 = scmp.eq.s32.totalorder %s16, 0
    %p131 = por %p129, %p130
    %p132 = scmp.ne.s32.totalorder %s118, %s119
    %p133 = scmp.eq.s32.totalorder %s17, 1
    %p134 = por %p132, %p133
    %p136 = scmp.ne.s32.totalorder %s119, %s135
    %p137 = scmp.eq.s32.totalorder %s17, 0
    %p138 = por %p136, %p137
    %p139 = scmp.le.s32.totalorder 1, %s11
    %p140 = scmp.lt.s32.totalorder %s11, 3
    %p141 = pnand %p139, %p140
    %p142 = pneg %p141
    // Predicated region
    $region9: #{vector_quantize.1} parent=5 // pred_check
      _
    $region10: #{vector_quantize.1} parent=5 // pred_check_branch
      %144 = sbr.rel (%p141) target = $region12
    $region11: #{vector_quantize.1} parent=5 // pred_region
      %s145 = ssub.s32 %s11, 1
      // Predicated region
      $region13: #{vector_quantize.1} parent=11 // pred_check
        %p146 = pneg %p58
      $region14: #{vector_quantize.1} parent=11 // pred_check_branch
        %148 = sbr.rel (%p146) target = $region16
      $region15: #{vector_quantize.1} parent=11 // pred_region
        _
      $region16: #{vector_quantize.1} parent=11 // pred_fallthru
        _
      // Predicated region
      $region17: #{vector_quantize.1} parent=11 // pred_check
        %p149 = pneg %p79
      $region18: #{vector_quantize.1} parent=11 // pred_check_branch
        %151 = sbr.rel (%p149) target = $region20
      $region19: #{vector_quantize.1} parent=11 // pred_region
        _
      $region20: #{vector_quantize.1} parent=11 // pred_fallthru
        _
    $region12: #{vector_quantize.1} parent=5 // pred_fallthru
      _
    %p152 = scmp.lt.s32.totalorder %s11, 2
    // Predicated region
    $region21: #{vector_quantize.1} parent=5 // pred_check
      %p153 = pneg %p152
    $region22: #{vector_quantize.1} parent=5 // pred_check_branch
      %155 = sbr.rel (%p153) target = $region24
    $region23: #{vector_quantize.1} parent=5 // pred_region
      // Predicated region
      $region25: #{vector_quantize.1} parent=23 // pred_check
        %p156 = pneg %p31
      $region26: #{vector_quantize.1} parent=23 // pred_check_branch
        %158 = sbr.rel (%p156) target = $region28
      $region27: #{vector_quantize.1} parent=23 // pred_region
        %s159 = smul.u32 8, %s11
        %p160 = scmp.lt.s32.totalorder %s159, 15
        %s161 = scalar_select %p160, %s159, 15
        %s162 = smul.addr %s161, 8
        %s163 = scalar_lea.vmem %s0, %s162
        %s164 = smul.u32 8, %s11
      $region28: #{vector_quantize.1} parent=23 // pred_fallthru
        _
    $region24: #{vector_quantize.1} parent=5 // pred_fallthru
      _
    %p165 = scmp.le.s32.totalorder 1, %s11
    %p166 = scmp.lt.s32.totalorder %s11, 3
    %p167 = pnand %p165, %p166
    %p168 = pneg %p167
    // Predicated region
    $region29: #{vector_quantize.1} parent=5 // pred_check
      _
    $region30: #{vector_quantize.1} parent=5 // pred_check_branch
      %170 = sbr.rel (%p167) target = $region32
    $region31: #{vector_quantize.1} parent=5 // pred_region
      %s171 = ssub.s32 %s11, 1
      %s172 = smul.u32 8, %s16
      %p173 = scmp.lt.s32.totalorder %s172, 15
      %s174 = scalar_select %p173, %s172, 15
      %s175 = smul.addr %s174, 8
      %s176 = scalar_lea.vmem %s0, %s175
      %p177 = pneg %p37
      %p178 = pneg %p34
      %p179 = pneg %p58
      %p180 = pneg %p55
      %p181 = pneg %p79
      %p182 = pneg %p76
      %p183 = pneg %p105
      %p184 = pneg %p102
      %s185 = smul.u32 8, %s16
      %p186 = scmp.lt.s32.totalorder %s185, 15
      %s187 = scalar_select %p186, %s185, 15
      %s188 = smul.addr %s187, 8
      %s189 = scalar_lea.vmem %s3, %s188
      %p190 = pneg %p131
      %p191 = pneg %p128
      %p192 = scmp.lt.s32.totalorder %s16, 1
      %s193 = scalar_select %p192, %s16, 1
      %s194 = scalar_lea.vmem %s4, %s193
      %s195 = smul.u32 8, %s16
      %p196 = scmp.lt.s32.totalorder %s195, 15
      %s197 = scalar_select %p196, %s195, 15
      %s198 = smul.addr %s197, 8
      %s199 = scalar_lea.vmem %s0, %s198
      %s200 = smul.u32 8, %s16
      %s201 = smul.u32 8, %s16
      %p202 = scmp.lt.s32.totalorder %s201, 15
      %s203 = scalar_select %p202, %s201, 15
      %s204 = smul.addr %s203, 8
      %s205 = scalar_lea.vmem %s3, %s204
      %s206 = smul.u32 8, %s16
      %p207 = scmp.lt.s32.totalorder %s16, 1
      %s208 = scalar_select %p207, %s16, 1
      %s209 = scalar_lea.vmem %s4, %s208
      %v210 = vld [vmem:[%s199] sm:$0xff]
      %v211 = vld [vmem:[%s199 + $0x8] sm:$0xff]
      %v212 = vld [vmem:[%s199 + $0x10] sm:$0xff]
      %v213 = vld [vmem:[%s199 + $0x18] sm:$0xff]
      %v214 = vld [vmem:[%s199 + $0x20] sm:$0xff]
      %v215 = vld [vmem:[%s199 + $0x28] sm:$0xff]
      %v216 = vld [vmem:[%s199 + $0x30] sm:$0xff]
      %v217 = vld [vmem:[%s199 + $0x38] sm:$0xff]
      %v218 = vld [vmem:[%s1] sm:$0xff]
      %v219 = vld [vmem:[%s1 + $0x8] sm:$0xff]
      %v220 = vld [vmem:[%s1 + $0x10] sm:$0xff]
      %v221 = vld [vmem:[%s1 + $0x18] sm:$0xff]
      %v222 = vld [vmem:[%s1 + $0x20] sm:$0xff]
      %v223 = vld [vmem:[%s1 + $0x28] sm:$0xff]
      %v224 = vld [vmem:[%s1 + $0x30] sm:$0xff]
      %v225 = vld [vmem:[%s1 + $0x38] sm:$0xff]
      %vm226 = vcmask 261120
      %v228 = vsel %vm226, %v210, 0
      %v231 = vsel %vm226, %v211, 0
      %v234 = vsel %vm226, %v212, 0
      %v237 = vsel %vm226, %v213, 0
      %v240 = vsel %vm226, %v214, 0
      %v243 = vsel %vm226, %v215, 0
      %v246 = vsel %vm226, %v216, 0
      %v249 = vsel %vm226, %v217, 0
      %v252 = vsel %vm226, %v218, 0
      %v255 = vsel %vm226, %v219, 0
      %v258 = vsel %vm226, %v220, 0
      %v261 = vsel %vm226, %v221, 0
      %v264 = vsel %vm226, %v222, 0
      %v267 = vsel %vm226, %v223, 0
      %v270 = vsel %vm226, %v224, 0
      %v273 = vsel %vm226, %v225, 0
      %275 = vmatprep.subr.mxu0 0.0
      %276 = vmatpush1.xpose.msra.mxu0 %v252
      %277 = vmatprep.subr.mxu0 0.0
      %278 = vmatpush1.xpose.msra.mxu0 %v255
      %279 = vmatprep.subr.mxu0 0.0
      %280 = vmatpush1.xpose.msra.mxu0 %v258
      %281 = vmatprep.subr.mxu0 0.0
      %282 = vmatpush1.xpose.msra.mxu0 %v261
      %283 = vmatprep.subr.mxu0 0.0
      %284 = vmatpush1.xpose.msra.mxu0 %v264
      %285 = vmatprep.subr.mxu0 0.0
      %286 = vmatpush1.xpose.msra.mxu0 %v267
      %287 = vmatprep.subr.mxu0 0.0
      %288 = vmatpush1.xpose.msra.mxu0 %v270
      %289 = vmatprep.subr.mxu0 0.0
      %290 = vmatpush1.xpose.msra.mxu0 %v273
      %291 = vmatprep.subr.mxu0 0.0
      %292 = vmatpush1.xpose.msra.mxu0 0.0
      %293 = vmatprep.subr.mxu0 0.0
      %294 = vmatpush1.xpose.msra.mxu0 0.0
      %295 = vmatprep.subr.mxu0 0.0
      %296 = vmatpush1.xpose.msra.mxu0 0.0
      %297 = vmatprep.subr.mxu0 0.0
      %298 = vmatpush1.xpose.msra.mxu0 0.0
      %299 = vmatprep.subr.mxu0 0.0
      %300 = vmatpush1.xpose.msra.mxu0 0.0
      %301 = vmatprep.subr.mxu0 0.0
      %302 = vmatpush1.xpose.msra.mxu0 0.0
      %303 = vmatprep.subr.mxu0 0.0
      %304 = vmatpush1.xpose.msra.mxu0 0.0
      %305 = vmatprep.subr.mxu0 0.0
      %306 = vmatpush1.xpose.msra.mxu0 0.0
      %307 = vmatprep.subr.mxu0 0.0
      %308 = vmatpush1.xpose.msra.mxu0 0.0
      %309 = vmatprep.subr.mxu0 0.0
      %310 = vmatpush1.xpose.msra.mxu0 0.0
      %311 = vmatprep.subr.mxu0 0.0
      %312 = vmatpush1.xpose.msra.mxu0 0.0
      %313 = vmatprep.subr.mxu0 0.0
      %314 = vmatpush1.xpose.msra.mxu0 0.0
      %315 = vmatprep.subr.mxu0 0.0
      %316 = vmatpush1.xpose.msra.mxu0 0.0
      %317 = vmatprep.subr.mxu0 0.0
      %318 = vmatpush1.xpose.msra.mxu0 0.0
      %319 = vmatprep.subr.mxu0 0.0
      %320 = vmatpush1.xpose.msra.mxu0 0.0
      %321 = vmatprep.subr.mxu0 0.0
      %322 = vmatpush1.xpose.msra.mxu0 0.0
      %323 = vmatprep.subr.mxu0 0.0
      %324 = vmatpush1.xpose.msra.mxu0 0.0
      %325 = vmatprep.subr.mxu0 0.0
      %326 = vmatpush1.xpose.msra.mxu0 0.0
      %327 = vmatprep.subr.mxu0 0.0
      %328 = vmatpush1.xpose.msra.mxu0 0.0
      %329 = vmatprep.subr.mxu0 0.0
      %330 = vmatpush1.xpose.msra.mxu0 0.0
      %331 = vmatprep.subr.mxu0 0.0
      %332 = vmatpush1.xpose.msra.mxu0 0.0
      %333 = vmatprep.subr.mxu0 0.0
      %334 = vmatpush1.xpose.msra.mxu0 0.0
      %335 = vmatprep.subr.mxu0 0.0
      %336 = vmatpush1.xpose.msra.mxu0 0.0
      %337 = vmatprep.subr.mxu0 0.0
      %338 = vmatpush1.xpose.msra.mxu0 0.0
      %339 = vmatprep.mubr.f32.mxu0 0.0
      %340 = vmatmul.mubr.f32.gmra.mrb[0].mxu0 %v228
      %v341 = vpop.f32.mrb[0].mxu0
      %v342 = vadd.f32 0.0, %v341
      %v343 = vpop.f32.mrb[0].mxu0
      %344 = vmatprep.mubr.f32.mxu0 0.0
      %345 = vmatmul.mubr.f32.gmra.mrb[0].mxu0 %v231
      %v346 = vpop.f32.mrb[0].mxu0
      %v347 = vadd.f32 0.0, %v346
      %v348 = vpop.f32.mrb[0].mxu0
      %349 = vmatprep.mubr.f32.mxu0 0.0
      %350 = vmatmul.mubr.f32.gmra.mrb[0].mxu0 %v234
      %v351 = vpop.f32.mrb[0].mxu0
      %v352 = vadd.f32 0.0, %v351
      %v353 = vpop.f32.mrb[0].mxu0
      %354 = vmatprep.mubr.f32.mxu0 0.0
      %355 = vmatmul.mubr.f32.gmra.mrb[0].mxu0 %v237
      %v356 = vpop.f32.mrb[0].mxu0
      %v357 = vadd.f32 0.0, %v356
      %v358 = vpop.f32.mrb[0].mxu0
      %359 = vmatprep.mubr.f32.mxu0 0.0
      %360 = vmatmul.mubr.f32.gmra.mrb[0].mxu0 %v240
      %v361 = vpop.f32.mrb[0].mxu0
      %v362 = vadd.f32 0.0, %v361
      %v363 = vpop.f32.mrb[0].mxu0
      %364 = vmatprep.mubr.f32.mxu0 0.0
      %365 = vmatmul.mubr.f32.gmra.mrb[0].mxu0 %v243
      %v366 = vpop.f32.mrb[0].mxu0
      %v367 = vadd.f32 0.0, %v366
      %v368 = vpop.f32.mrb[0].mxu0
      %369 = vmatprep.mubr.f32.mxu0 0.0
      %370 = vmatmul.mubr.f32.gmra.mrb[0].mxu0 %v246
      %v371 = vpop.f32.mrb[0].mxu0
      %v372 = vadd.f32 0.0, %v371
      %v373 = vpop.f32.mrb[0].mxu0
      %374 = vmatprep.mubr.f32.mxu0 0.0
      %375 = vmatmul.mubr.f32.gmra.mrb[0].mxu0 %v249
      %v376 = vpop.f32.mrb[0].mxu0
      %v377 = vadd.f32 0.0, %v376
      %v378 = vpop.f32.mrb[0].mxu0
      %379 = vdwg.mxu0
      %v380 = vld [vmem:[%s2] sm:$0x1]
      %v382 = vlaneseq
      %v383 = vshrl.u32 %v382, 7
      %v384 = vsub.s32 0, %v383
      %v385 = vrot.slane %v380, %v384
      %v387 = vsub.f32 %v385, %v342
      %v388 = vsub.f32 %v385, %v347
      %v389 = vsub.f32 %v385, %v352
      %v390 = vsub.f32 %v385, %v357
      %v391 = vsub.f32 %v385, %v362
      %v392 = vsub.f32 %v385, %v367
      %v393 = vsub.f32 %v385, %v372
      %v394 = vsub.f32 %v385, %v377
      %v395 = vlaneseq
      %v396 = vand.u32 %v395, 127
      %vm397 = vcmask 523264
      %v398 = vsel %vm397, %v387, inf
      %399 = vmin.xlane.f32.xlu0 %v398
      %v400 = vpop.xlane.xlu0 %399
      %v401 = vsel %vm397, %v388, inf
      %402 = vmin.xlane.f32.xlu0 %v401
      %v403 = vpop.xlane.xlu0 %402
      %v404 = vsel %vm397, %v389, inf
      %405 = vmin.xlane.f32.xlu0 %v404
      %v406 = vpop.xlane.xlu0 %405
      %v407 = vsel %vm397, %v390, inf
      %408 = vmin.xlane.f32.xlu0 %v407
      %v409 = vpop.xlane.xlu0 %408
      %v410 = vsel %vm397, %v391, inf
      %411 = vmin.xlane.f32.xlu0 %v410
      %v412 = vpop.xlane.xlu0 %411
      %v413 = vsel %vm397, %v392, inf
      %414 = vmin.xlane.f32.xlu0 %v413
      %v415 = vpop.xlane.xlu0 %414
      %v416 = vsel %vm397, %v393, inf
      %417 = vmin.xlane.f32.xlu0 %v416
      %v418 = vpop.xlane.xlu0 %417
      %v419 = vsel %vm397, %v394, inf
      %420 = vmin.xlane.f32.xlu0 %v419
      %v421 = vpop.xlane.xlu0 %420
      %vm422 = vcmp.eq.f32.partialorder %v387, %v400
      %vm423 = vcmp.eq.f32.partialorder %v388, %v403
      %vm424 = vcmp.eq.f32.partialorder %v389, %v406
      %vm425 = vcmp.eq.f32.partialorder %v390, %v409
      %vm426 = vcmp.eq.f32.partialorder %v391, %v412
      %vm427 = vcmp.eq.f32.partialorder %v392, %v415
      %vm428 = vcmp.eq.f32.partialorder %v393, %v418
      %vm429 = vcmp.eq.f32.partialorder %v394, %v421
      %v430 = vsel %vm422, %v396, 64
      %v431 = vsel %vm423, %v396, 64
      %v432 = vsel %vm424, %v396, 64
      %v433 = vsel %vm425, %v396, 64
      %v434 = vsel %vm426, %v396, 64
      %v435 = vsel %vm427, %v396, 64
      %v436 = vsel %vm428, %v396, 64
      %v437 = vsel %vm429, %v396, 64
      %v438 = vsel %vm397, %v430, 2147483647
      %v439 = vand.u32 %v438, 65535
      %v440 = vshra.s32 %v438, 16
      %v441 = vcvt.s32.f32 %v439
      %v442 = vcvt.s32.f32 %v440
      %443 = vmin.xlane.f32.xlu0 %v442
      %v444 = vpop.xlane.xlu0 %443
      %vm445 = vcmp.eq.f32.partialorder %v442, %v444
      %v446 = vsel %vm445, %v441, inf
      %447 = vmin.xlane.f32.xlu0 %v446
      %v448 = vpop.xlane.xlu0 %447
      %v449 = vcvt.f32.s32 %v448
      %v450 = vcvt.f32.s32 %v444
      %v451 = vshll.u32 %v450, 16
      %v452 = vadd.s32 %v451, %v449
      %v453 = vsel %vm397, %v431, 2147483647
      %v454 = vand.u32 %v453, 65535
      %v455 = vshra.s32 %v453, 16
      %v456 = vcvt.s32.f32 %v454
      %v457 = vcvt.s32.f32 %v455
      %458 = vmin.xlane.f32.xlu0 %v457
      %v459 = vpop.xlane.xlu0 %458
      %vm460 = vcmp.eq.f32.partialorder %v457, %v459
      %v461 = vsel %vm460, %v456, inf
      %462 = vmin.xlane.f32.xlu0 %v461
      %v463 = vpop.xlane.xlu0 %462
      %v464 = vcvt.f32.s32 %v463
      %v465 = vcvt.f32.s32 %v459
      %v466 = vshll.u32 %v465, 16
      %v467 = vadd.s32 %v466, %v464
      %v468 = vsel %vm397, %v432, 2147483647
      %v469 = vand.u32 %v468, 65535
      %v470 = vshra.s32 %v468, 16
      %v471 = vcvt.s32.f32 %v469
      %v472 = vcvt.s32.f32 %v470
      %473 = vmin.xlane.f32.xlu0 %v472
      %v474 = vpop.xlane.xlu0 %473
      %vm475 = vcmp.eq.f32.partialorder %v472, %v474
      %v476 = vsel %vm475, %v471, inf
      %477 = vmin.xlane.f32.xlu0 %v476
      %v478 = vpop.xlane.xlu0 %477
      %v479 = vcvt.f32.s32 %v478
      %v480 = vcvt.f32.s32 %v474
      %v481 = vshll.u32 %v480, 16
      %v482 = vadd.s32 %v481, %v479
      %v483 = vsel %vm397, %v433, 2147483647
      %v484 = vand.u32 %v483, 65535
      %v485 = vshra.s32 %v483, 16
      %v486 = vcvt.s32.f32 %v484
      %v487 = vcvt.s32.f32 %v485
      %488 = vmin.xlane.f32.xlu0 %v487
      %v489 = vpop.xlane.xlu0 %488
      %vm490 = vcmp.eq.f32.partialorder %v487, %v489
      %v491 = vsel %vm490, %v486, inf
      %492 = vmin.xlane.f32.xlu0 %v491
      %v493 = vpop.xlane.xlu0 %492
      %v494 = vcvt.f32.s32 %v493
      %v495 = vcvt.f32.s32 %v489
      %v496 = vshll.u32 %v495, 16
      %v497 = vadd.s32 %v496, %v494
      %v498 = vsel %vm397, %v434, 2147483647
      %v499 = vand.u32 %v498, 65535
      %v500 = vshra.s32 %v498, 16
      %v501 = vcvt.s32.f32 %v499
      %v502 = vcvt.s32.f32 %v500
      %503 = vmin.xlane.f32.xlu0 %v502
      %v504 = vpop.xlane.xlu0 %503
      %vm505 = vcmp.eq.f32.partialorder %v502, %v504
      %v506 = vsel %vm505, %v501, inf
      %507 = vmin.xlane.f32.xlu0 %v506
      %v508 = vpop.xlane.xlu0 %507
      %v509 = vcvt.f32.s32 %v508
      %v510 = vcvt.f32.s32 %v504
      %v511 = vshll.u32 %v510, 16
      %v512 = vadd.s32 %v511, %v509
      %v513 = vsel %vm397, %v435, 2147483647
      %v514 = vand.u32 %v513, 65535
      %v515 = vshra.s32 %v513, 16
      %v516 = vcvt.s32.f32 %v514
      %v517 = vcvt.s32.f32 %v515
      %518 = vmin.xlane.f32.xlu0 %v517
      %v519 = vpop.xlane.xlu0 %518
      %vm520 = vcmp.eq.f32.partialorder %v517, %v519
      %v521 = vsel %vm520, %v516, inf
      %522 = vmin.xlane.f32.xlu0 %v521
      %v523 = vpop.xlane.xlu0 %522
      %v524 = vcvt.f32.s32 %v523
      %v525 = vcvt.f32.s32 %v519
      %v526 = vshll.u32 %v525, 16
      %v527 = vadd.s32 %v526, %v524
      %v528 = vsel %vm397, %v436, 2147483647
      %v529 = vand.u32 %v528, 65535
      %v530 = vshra.s32 %v528, 16
      %v531 = vcvt.s32.f32 %v529
      %v532 = vcvt.s32.f32 %v530
      %533 = vmin.xlane.f32.xlu0 %v532
      %v534 = vpop.xlane.xlu0 %533
      %vm535 = vcmp.eq.f32.partialorder %v532, %v534
      %v536 = vsel %vm535, %v531, inf
      %537 = vmin.xlane.f32.xlu0 %v536
      %v538 = vpop.xlane.xlu0 %537
      %v539 = vcvt.f32.s32 %v538
      %v540 = vcvt.f32.s32 %v534
      %v541 = vshll.u32 %v540, 16
      %v542 = vadd.s32 %v541, %v539
      %v543 = vsel %vm397, %v437, 2147483647
      %v544 = vand.u32 %v543, 65535
      %v545 = vshra.s32 %v543, 16
      %v546 = vcvt.s32.f32 %v544
      %v547 = vcvt.s32.f32 %v545
      %548 = vmin.xlane.f32.xlu0 %v547
      %v549 = vpop.xlane.xlu0 %548
      %vm550 = vcmp.eq.f32.partialorder %v547, %v549
      %v551 = vsel %vm550, %v546, inf
      %552 = vmin.xlane.f32.xlu0 %v551
      %v553 = vpop.xlane.xlu0 %552
      %v554 = vcvt.f32.s32 %v553
      %v555 = vcvt.f32.s32 %v549
      %v556 = vshll.u32 %v555, 16
      %v557 = vadd.s32 %v556, %v554
      %vm558 = vcmp.lt.s32.totalorder %v452, 63
      %v559 = vsel %vm558, %v452, 63
      %vm560 = vcmp.lt.s32.totalorder %v467, 63
      %v561 = vsel %vm560, %v467, 63
      %vm562 = vcmp.lt.s32.totalorder %v482, 63
      %v563 = vsel %vm562, %v482, 63
      %vm564 = vcmp.lt.s32.totalorder %v497, 63
      %v565 = vsel %vm564, %v497, 63
      %vm566 = vcmp.lt.s32.totalorder %v512, 63
      %v567 = vsel %vm566, %v512, 63
      %vm568 = vcmp.lt.s32.totalorder %v527, 63
      %v569 = vsel %vm568, %v527, 63
      %vm570 = vcmp.lt.s32.totalorder %v542, 63
      %v571 = vsel %vm570, %v542, 63
      %vm572 = vcmp.lt.s32.totalorder %v557, 63
      %v573 = vsel %vm572, %v557, 63
      %vm574 = vcmp.eq.s32.totalorder %v396, %v559
      %vm575 = vcmp.eq.s32.totalorder %v396, %v561
      %vm576 = vcmp.eq.s32.totalorder %v396, %v563
      %vm577 = vcmp.eq.s32.totalorder %v396, %v565
      %vm578 = vcmp.eq.s32.totalorder %v396, %v567
      %vm579 = vcmp.eq.s32.totalorder %v396, %v569
      %vm580 = vcmp.eq.s32.totalorder %v396, %v571
      %vm581 = vcmp.eq.s32.totalorder %v396, %v573
      %v582 = vsel %vm574, 1, 0
      %v583 = vsel %vm575, 1, 0
      %v584 = vsel %vm576, 1, 0
      %v585 = vsel %vm577, 1, 0
      %v586 = vsel %vm578, 1, 0
      %v587 = vsel %vm579, 1, 0
      %v588 = vsel %vm580, 1, 0
      %v589 = vsel %vm581, 1, 0
      %v590 = vcvt.s32.f32 %v582
      %v591 = vcvt.s32.f32 %v583
      %v592 = vcvt.s32.f32 %v584
      %v593 = vcvt.s32.f32 %v585
      %v594 = vcvt.s32.f32 %v586
      %v595 = vcvt.s32.f32 %v587
      %v596 = vcvt.s32.f32 %v588
      %v597 = vcvt.s32.f32 %v589
      %v599 = vsel %vm397, %v590, 0
      %v602 = vsel %vm397, %v591, 0
      %v605 = vsel %vm397, %v592, 0
      %v608 = vsel %vm397, %v593, 0
      %v611 = vsel %vm397, %v594, 0
      %v614 = vsel %vm397, %v595, 0
      %v617 = vsel %vm397, %v596, 0
      %v620 = vsel %vm397, %v597, 0
      %622 = vmatprep.subr.mxu0 0.0
      %623 = vmatpush1.msra.mxu0 %v218
      %624 = vmatprep.subr.mxu0 0.0
      %625 = vmatpush1.msra.mxu0 %v219
      %626 = vmatprep.subr.mxu0 0.0
      %627 = vmatpush1.msra.mxu0 %v220
      %628 = vmatprep.subr.mxu0 0.0
      %629 = vmatpush1.msra.mxu0 %v221
      %630 = vmatprep.subr.mxu0 0.0
      %631 = vmatpush1.msra.mxu0 %v222
      %632 = vmatprep.subr.mxu0 0.0
      %633 = vmatpush1.msra.mxu0 %v223
      %634 = vmatprep.subr.mxu0 0.0
      %635 = vmatpush1.msra.mxu0 %v224
      %636 = vmatprep.subr.mxu0 0.0
      %637 = vmatpush1.msra.mxu0 %v225
      %638 = vmatprep.subr.mxu0 0.0
      %639 = vmatpush1.msra.mxu0 0.0
      %640 = vmatprep.subr.mxu0 0.0
      %641 = vmatpush1.msra.mxu0 0.0
      %642 = vmatprep.subr.mxu0 0.0
      %643 = vmatpush1.msra.mxu0 0.0
      %644 = vmatprep.subr.mxu0 0.0
      %645 = vmatpush1.msra.mxu0 0.0
      %646 = vmatprep.subr.mxu0 0.0
      %647 = vmatpush1.msra.mxu0 0.0
      %648 = vmatprep.subr.mxu0 0.0
      %649 = vmatpush1.msra.mxu0 0.0
      %650 = vmatprep.subr.mxu0 0.0
      %651 = vmatpush1.msra.mxu0 0.0
      %652 = vmatprep.subr.mxu0 0.0
      %653 = vmatpush1.msra.mxu0 0.0
      %654 = vmatprep.subr.mxu0 0.0
      %655 = vmatpush1.msra.mxu0 0.0
      %656 = vmatprep.subr.mxu0 0.0
      %657 = vmatpush1.msra.mxu0 0.0
      %658 = vmatprep.subr.mxu0 0.0
      %659 = vmatpush1.msra.mxu0 0.0
      %660 = vmatprep.subr.mxu0 0.0
      %661 = vmatpush1.msra.mxu0 0.0
      %662 = vmatprep.subr.mxu0 0.0
      %663 = vmatpush1.msra.mxu0 0.0
      %664 = vmatprep.subr.mxu0 0.0
      %665 = vmatpush1.msra.mxu0 0.0
      %666 = vmatprep.subr.mxu0 0.0
      %667 = vmatpush1.msra.mxu0 0.0
      %668 = vmatprep.subr.mxu0 0.0
      %669 = vmatpush1.msra.mxu0 0.0
      %670 = vmatprep.subr.mxu0 0.0
      %671 = vmatpush1.msra.mxu0 0.0
      %672 = vmatprep.subr.mxu0 0.0
      %673 = vmatpush1.msra.mxu0 0.0
      %674 = vmatprep.subr.mxu0 0.0
      %675 = vmatpush1.msra.mxu0 0.0
      %676 = vmatprep.subr.mxu0 0.0
      %677 = vmatpush1.msra.mxu0 0.0
      %678 = vmatprep.subr.mxu0 0.0
      %679 = vmatpush1.msra.mxu0 0.0
      %680 = vmatprep.subr.mxu0 0.0
      %681 = vmatpush1.msra.mxu0 0.0
      %682 = vmatprep.subr.mxu0 0.0
      %683 = vmatpush1.msra.mxu0 0.0
      %684 = vmatprep.subr.mxu0 0.0
      %685 = vmatpush1.msra.mxu0 0.0
      %686 = vmatprep.mubr.f32.mxu0 0.0
      %687 = vmatmul.mubr.f32.gmra.mrb[0].mxu0 %v599
      %v688 = vpop.f32.mrb[0].mxu0
      %v689 = vadd.f32 0.0, %v688
      %v690 = vpop.f32.mrb[0].mxu0
      %691 = vmatprep.mubr.f32.mxu0 0.0
      %692 = vmatmul.mubr.f32.gmra.mrb[0].mxu0 %v602
      %v693 = vpop.f32.mrb[0].mxu0
      %v694 = vadd.f32 0.0, %v693
      %v695 = vpop.f32.mrb[0].mxu0
      %696 = vmatprep.mubr.f32.mxu0 0.0
      %697 = vmatmul.mubr.f32.gmra.mrb[0].mxu0 %v605
      %v698 = vpop.f32.mrb[0].mxu0
      %v699 = vadd.f32 0.0, %v698
      %v700 = vpop.f32.mrb[0].mxu0
      %701 = vmatprep.mubr.f32.mxu0 0.0
      %702 = vmatmul.mubr.f32.gmra.mrb[0].mxu0 %v608
      %v703 = vpop.f32.mrb[0].mxu0
      %v704 = vadd.f32 0.0, %v703
      %v705 = vpop.f32.mrb[0].mxu0
      %706 = vmatprep.mubr.f32.mxu0 0.0
      %707 = vmatmul.mubr.f32.gmra.mrb[0].mxu0 %v611
      %v708 = vpop.f32.mrb[0].mxu0
      %v709 = vadd.f32 0.0, %v708
      %v710 = vpop.f32.mrb[0].mxu0
      %711 = vmatprep.mubr.f32.mxu0 0.0
      %712 = vmatmul.mubr.f32.gmra.mrb[0].mxu0 %v614
      %v713 = vpop.f32.mrb[0].mxu0
      %v714 = vadd.f32 0.0, %v713
      %v715 = vpop.f32.mrb[0].mxu0
      %716 = vmatprep.mubr.f32.mxu0 0.0
      %717 = vmatmul.mubr.f32.gmra.mrb[0].mxu0 %v617
      %v718 = vpop.f32.mrb[0].mxu0
      %v719 = vadd.f32 0.0, %v718
      %v720 = vpop.f32.mrb[0].mxu0
      %721 = vmatprep.mubr.f32.mxu0 0.0
      %722 = vmatmul.mubr.f32.gmra.mrb[0].mxu0 %v620
      %v723 = vpop.f32.mrb[0].mxu0
      %v724 = vadd.f32 0.0, %v723
      %v725 = vpop.f32.mrb[0].mxu0
      %726 = vdwg.mxu0
      %727 = vst.msk [vmem:[%s205] sm:$0xff] %vm226, %v689
      %728 = vst.msk [vmem:[%s205 + $0x8] sm:$0xff] %vm226, %v694
      %729 = vst.msk [vmem:[%s205 + $0x10] sm:$0xff] %vm226, %v699
      %730 = vst.msk [vmem:[%s205 + $0x18] sm:$0xff] %vm226, %v704
      %731 = vst.msk [vmem:[%s205 + $0x20] sm:$0xff] %vm226, %v709
      %732 = vst.msk [vmem:[%s205 + $0x28] sm:$0xff] %vm226, %v714
      %733 = vst.msk [vmem:[%s205 + $0x30] sm:$0xff] %vm226, %v719
      %734 = vst.msk [vmem:[%s205 + $0x38] sm:$0xff] %vm226, %v724
      %s735 = smul.u32 %s16, 64
      %v736 = vlaneseq
      %v737 = vshrl.u32 %v736, 7
      %v738 = vadd.s32 %v737, 8
      %v739 = vadd.s32 %v737, 16
      %v740 = vadd.s32 %v737, 24
      %v741 = vadd.s32 %v737, 32
      %v742 = vadd.s32 %v737, 40
      %v743 = vadd.s32 %v737, 48
      %v744 = vadd.s32 %v737, 56
      %v745 = vstv %s735
      %v746 = vadd.s32 %v745, %v737
      %v747 = vadd.s32 %v745, %v738
      %v748 = vadd.s32 %v745, %v739
      %v749 = vadd.s32 %v745, %v740
      %v750 = vadd.s32 %v745, %v741
      %v751 = vadd.s32 %v745, %v742
      %v752 = vadd.s32 %v745, %v743
      %v753 = vadd.s32 %v745, %v744
      %vm754 = vcmp.lt.s32.totalorder %v746, 128
      %vm755 = vcmp.lt.s32.totalorder %v747, 128
      %vm756 = vcmp.lt.s32.totalorder %v748, 128
      %vm757 = vcmp.lt.s32.totalorder %v749, 128
      %vm758 = vcmp.lt.s32.totalorder %v750, 128
      %vm759 = vcmp.lt.s32.totalorder %v751, 128
      %vm760 = vcmp.lt.s32.totalorder %v752, 128
      %vm761 = vcmp.lt.s32.totalorder %v753, 128
      %v762 = vsel %vm754, 1, 0
      %v763 = vsel %vm755, 1, 0
      %v764 = vsel %vm756, 1, 0
      %v765 = vsel %vm757, 1, 0
      %v766 = vsel %vm758, 1, 0
      %v767 = vsel %vm759, 1, 0
      %v768 = vsel %vm760, 1, 0
      %v769 = vsel %vm761, 1, 0
      %v770 = vcvt.s32.f32 %v762
      %v771 = vcvt.s32.f32 %v763
      %v772 = vcvt.s32.f32 %v764
      %v773 = vcvt.s32.f32 %v765
      %v774 = vcvt.s32.f32 %v766
      %v775 = vcvt.s32.f32 %v767
      %v776 = vcvt.s32.f32 %v768
      %v777 = vcvt.s32.f32 %v769
      %v778 = vsub.f32 %v689, %v210
      %v779 = vsub.f32 %v694, %v211
      %v780 = vsub.f32 %v699, %v212
      %v781 = vsub.f32 %v704, %v213
      %v782 = vsub.f32 %v709, %v214
      %v783 = vsub.f32 %v714, %v215
      %v784 = vsub.f32 %v719, %v216
      %v785 = vsub.f32 %v724, %v217
      %v786 = vmul.f32 %v778, %v778
      %v787 = vmul.f32 %v779, %v779
      %v788 = vmul.f32 %v780, %v780
      %v789 = vmul.f32 %v781, %v781
      %v790 = vmul.f32 %v782, %v782
      %v791 = vmul.f32 %v783, %v783
      %v792 = vmul.f32 %v784, %v784
      %v793 = vmul.f32 %v785, %v785
      %v794 = vmul.f32 %v786, %v770
      %v795 = vmul.f32 %v787, %v771
      %v796 = vmul.f32 %v788, %v772
      %v797 = vmul.f32 %v789, %v773
      %v798 = vmul.f32 %v790, %v774
      %v799 = vmul.f32 %v791, %v775
      %v800 = vmul.f32 %v792, %v776
      %v801 = vmul.f32 %v793, %v777
      %v802 = vsel %vm226, %v794, 0.0
      %v803 = vsel %vm226, %v795, 0.0
      %v804 = vadd.f32 %v802, %v803
      %v805 = vsel %vm226, %v796, 0.0
      %v806 = vadd.f32 %v804, %v805
      %v807 = vsel %vm226, %v797, 0.0
      %v808 = vadd.f32 %v806, %v807
      %v809 = vsel %vm226, %v798, 0.0
      %v810 = vadd.f32 %v808, %v809
      %v811 = vsel %vm226, %v799, 0.0
      %v812 = vadd.f32 %v810, %v811
      %v813 = vsel %vm226, %v800, 0.0
      %v814 = vadd.f32 %v812, %v813
      %v815 = vsel %vm226, %v801, 0.0
      %v816 = vadd.f32 %v814, %v815
      %817 = vadd.xlane.f32.xlu0 %v816
      %v818 = vpop.xlane.xlu0 %817
      %v819 = vrot.slane %v818, 4
      %v820 = vadd.f32 %v818, %v819
      %v821 = vrot.slane %v820, 2
      %v822 = vadd.f32 %v820, %v821
      %v823 = vrot.slane %v822, 1
      %v824 = vadd.f32 %v822, %v823
      %s825 = vtos %v824
      %v826 = vstv %s825
      %827 = vst [vmem:[%s209] sm:$0x1] %v826
      %s828 = smul.u32 8, %s16
      %p829 = scmp.lt.s32.totalorder %s828, 15
      %s830 = scalar_select %p829, %s828, 15
      %s831 = smul.addr %s830, 8
      %s832 = scalar_lea.vmem %s3, %s831
      %p833 = scmp.lt.s32.totalorder %s16, 1
      %s834 = scalar_select %p833, %s16, 1
      %s835 = scalar_lea.vmem %s4, %s834
      // Predicated region
      $region33: #{vector_quantize.1} parent=31 // pred_check
        %p836 = pneg %p102
      $region34: #{vector_quantize.1} parent=31 // pred_check_branch
        %838 = sbr.rel (%p836) target = $region36
      $region35: #{vector_quantize.1} parent=31 // pred_region
        %s839 = smul.u32 8, %s16
      $region36: #{vector_quantize.1} parent=31 // pred_fallthru
        _
      // Predicated region
      $region37: #{vector_quantize.1} parent=31 // pred_check
        %p840 = pneg %p128
      $region38: #{vector_quantize.1} parent=31 // pred_check_branch
        %842 = sbr.rel (%p840) target = $region40
      $region39: #{vector_quantize.1} parent=31 // pred_region
        _
      $region40: #{vector_quantize.1} parent=31 // pred_fallthru
        _
    $region32: #{vector_quantize.1} parent=5 // pred_fallthru
      _
    %p843 = scmp.le.s32.totalorder 2, %s11
    // Predicated region
    $region41: #{vector_quantize.1} parent=5 // pred_check
      %p844 = pneg %p843
    $region42: #{vector_quantize.1} parent=5 // pred_check_branch
      %846 = sbr.rel (%p844) target = $region44
    $region43: #{vector_quantize.1} parent=5 // pred_region
      %s847 = ssub.s32 %s11, 2
      // Predicated region
      $region45: #{vector_quantize.1} parent=43 // pred_check
        %p848 = pneg %p108
      $region46: #{vector_quantize.1} parent=43 // pred_check_branch
        %850 = sbr.rel (%p848) target = $region48
      $region47: #{vector_quantize.1} parent=43 // pred_region
        %s851 = smul.u32 8, %s17
        %p852 = scmp.lt.s32.totalorder %s851, 15
        %s853 = scalar_select %p852, %s851, 15
        %s854 = smul.addr %s853, 8
        %s855 = scalar_lea.vmem %s3, %s854
      $region48: #{vector_quantize.1} parent=43 // pred_fallthru
        _
      // Predicated region
      $region49: #{vector_quantize.1} parent=43 // pred_check
        %p856 = pneg %p134
      $region50: #{vector_quantize.1} parent=43 // pred_check_branch
        %858 = sbr.rel (%p856) target = $region52
      $region51: #{vector_quantize.1} parent=43 // pred_region
        %p859 = scmp.lt.s32.totalorder %s17, 1
        %s860 = scalar_select %p859, %s17, 1
        %s861 = scalar_lea.vmem %s4, %s860
      $region52: #{vector_quantize.1} parent=43 // pred_fallthru
        _
    $region44: #{vector_quantize.1} parent=5 // pred_fallthru
      _
  $region6: #{vector_quantize.1} parent=0 // loop_footer
    %s15 = sadd.s32 1, %s11
  $region7: #{vector_quantize.1} parent=0 // loop_footer_branch
    %10 = sbr.rel target = $region3
  $region8: #{vector_quantize.1} parent=0 // loop_exit
    _

</llo_original>
